<compile_context>
chip_gen: v7x
topology: tpu7x:2x2x1
jax: 0.10.0
libtpu: 0.0.40
codegen_flags: <defaults>
</compile_context>

<pallas_src>
import jax
import jax.numpy as jnp
from jax.experimental import pallas as pl
from jax.experimental.pallas import tpu as pltpu

INPUT_SIZE = 42
HIDDEN1 = 128
HIDDEN2 = 64
NUM_CLASSES = 5
OUT_PAD = 128            # lane-dense padded width of the final layer
DEFAULT_TILE_M = 1024    # batch tile; double-buffered tiles stay well under scoped VMEM


def mlp_kernel(x_ref, w1_ref, b1_ref, w2_ref, b2_ref, w3_ref, b3_ref, o_ref):
    # Cast the x tile to bf16 in VMEM (f32 arrives via DMA; cast is VPU filler).
    x_bf16 = x_ref[...].astype(jnp.bfloat16)
    # fc1 + ReLU  (dropout = identity in eval). bf16 operands -> f32 accumulate.
    h1 = jnp.dot(x_bf16, w1_ref[...], preferred_element_type=jnp.float32)
    h1 = jnp.maximum(h1 + b1_ref[...], 0.0)
    # fc2 + ReLU  (dropout = identity in eval)
    h2 = jnp.dot(h1.astype(w2_ref.dtype), w2_ref[...],
                 preferred_element_type=jnp.float32)
    h2 = jnp.maximum(h2 + b2_ref[...], 0.0)
    # fc3 (logits, lane-dense padded to 128)
    out = jnp.dot(h2.astype(w3_ref.dtype), w3_ref[...],
                  preferred_element_type=jnp.float32)
    o_ref[...] = (out + b3_ref[...]).astype(o_ref.dtype)


def mlp_forward(x, w1, b1, w2, b2, w3, b3, *, tile_m=DEFAULT_TILE_M):
    batch = x.shape[0]

    # Batch tile: multiple of 8 (sublane), capped at tile_m (VMEM-safe on v5e/v6e/v7x).
    tm = min(tile_m, max(8, ((batch + 7) // 8) * 8))
    padded_batch = ((batch + tm - 1) // tm) * tm
    if padded_batch != batch:
        x = jnp.pad(x, ((0, padded_batch - batch), (0, 0)))

    # bf16 matmul operands for the (tiny, one-time-cast) weights.
    w1b = w1.astype(jnp.bfloat16)
    w2b = w2.astype(jnp.bfloat16)

    # Lane-dense final layer: pad (64, 5) -> (64, 128) and (1, 5) -> (1, 128).
    w3p = jnp.zeros((HIDDEN2, OUT_PAD), jnp.bfloat16).at[:, :NUM_CLASSES].set(
        w3.astype(jnp.bfloat16))
    b3p = jnp.zeros((1, OUT_PAD), jnp.float32).at[:, :NUM_CLASSES].set(b3)

    grid = (padded_batch // tm,)

    def pinned(shape):
        # Weights/biases: whole array resident in VMEM across all grid steps.
        return pl.BlockSpec(shape, lambda i: (0, 0))

    cost = pl.CostEstimate(
        flops=2 * padded_batch * (INPUT_SIZE * HIDDEN1
                                  + HIDDEN1 * HIDDEN2
                                  + HIDDEN2 * OUT_PAD),
        transcendentals=0,
        bytes_accessed=(padded_batch * INPUT_SIZE * 4          # x (f32)
                        + padded_batch * OUT_PAD * 4           # out (f32)
                        + (INPUT_SIZE * HIDDEN1 + HIDDEN1 * HIDDEN2
                           + HIDDEN2 * OUT_PAD) * 2            # weights (bf16)
                        + (HIDDEN1 + HIDDEN2 + OUT_PAD) * 4),  # biases (f32)
    )

    out_padded = pl.pallas_call(
        mlp_kernel,
        out_shape=jax.ShapeDtypeStruct((padded_batch, OUT_PAD), jnp.float32),
        grid=grid,
        in_specs=[
            pl.BlockSpec((tm, INPUT_SIZE), lambda i: (i, 0)),  # x: tiled over batch
            pinned((INPUT_SIZE, HIDDEN1)),
            pinned((1, HIDDEN1)),
            pinned((HIDDEN1, HIDDEN2)),
            pinned((1, HIDDEN2)),
            pinned((HIDDEN2, OUT_PAD)),
            pinned((1, OUT_PAD)),
        ],
        out_specs=pl.BlockSpec((tm, OUT_PAD), lambda i: (i, 0)),
        compiler_params=pltpu.CompilerParams(
            dimension_semantics=("parallel",)),
        cost_estimate=cost,
    )(x, w1b, b1, w2b, b2, w3p, b3p)

    return out_padded[:batch, :NUM_CLASSES]


def init_params(key):
    """Deterministic init mimicking nn.Linear's U(-1/sqrt(fan_in), 1/sqrt(fan_in))."""
    def linear(k, fan_in, fan_out):
        kw, kb = jax.random.split(k)
        bound = 1.0 / jnp.sqrt(fan_in)
        # stored as (in, out) so kernel does x @ W
        w = jax.random.uniform(kw, (fan_in, fan_out), jnp.float32, -bound, bound)
        b = jax.random.uniform(kb, (1, fan_out), jnp.float32, -bound, bound)
        return w, b

    k1, k2, k3 = jax.random.split(key, 3)
    w1, b1 = linear(k1, INPUT_SIZE, HIDDEN1)
    w2, b2 = linear(k2, HIDDEN1, HIDDEN2)
    w3, b3 = linear(k3, HIDDEN2, NUM_CLASSES)
    return w1, b1, w2, b2, w3, b3


def reference_forward_bf16(x, w1, b1, w2, b2, w3, b3):
    """Mirrors the kernel: bf16 matmul operands, f32 accumulation/elementwise."""
    h1 = jnp.maximum(jnp.dot(x.astype(jnp.bfloat16), w1.astype(jnp.bfloat16),
                             preferred_element_type=jnp.float32) + b1, 0.0)
    h2 = jnp.maximum(jnp.dot(h1.astype(jnp.bfloat16), w2.astype(jnp.bfloat16),
                             preferred_element_type=jnp.float32) + b2, 0.0)
    return jnp.dot(h2.astype(jnp.bfloat16), w3.astype(jnp.bfloat16),
                   preferred_element_type=jnp.float32) + b3


def reference_forward_f32(x, w1, b1, w2, b2, w3, b3):
    h1 = jnp.maximum(x @ w1 + b1, 0.0)
    h2 = jnp.maximum(h1 @ w2 + b2, 0.0)
    return h2 @ w3 + b3


if __name__ == "__main__":
    key = jax.random.PRNGKey(0)
    kx, kp = jax.random.split(key)

    batch = 8
    x = jax.random.normal(kx, (batch, INPUT_SIZE), jnp.float32)
    params = init_params(kp)

    fwd = jax.jit(mlp_forward)
    out = fwd(x, *params)
    out = jax.block_until_ready(out)
    assert out.shape == (batch, NUM_CLASSES)

    # Match against a reference that uses the same bf16-operand / f32-accumulate path.
    ref_bf16 = reference_forward_bf16(x, *params)
    assert jnp.allclose(out, ref_bf16, atol=1e-3, rtol=1e-3), "mismatch vs bf16 reference"

    # Sanity-check overall semantics against the full-f32 reference (loose tolerance
    # accounts for bf16 matmul operands).
    ref_f32 = reference_forward_f32(x, *params)
    assert jnp.allclose(out, ref_f32, atol=3e-2, rtol=3e-2), "mismatch vs f32 reference"

    print("KERNEL_OK")
</pallas_src>

<mosaic_0001>
module attributes {stable_mosaic.version = 11 : i64} {
  func.func @mlp_kernel(%arg0: i32, %arg1: memref<8x42xf32, #tpu.memory_space<vmem>>, %arg2: memref<42x128xbf16, #tpu.memory_space<vmem>>, %arg3: memref<1x128xf32, #tpu.memory_space<vmem>>, %arg4: memref<128x64xbf16, #tpu.memory_space<vmem>>, %arg5: memref<1x64xf32, #tpu.memory_space<vmem>>, %arg6: memref<64x128xbf16, #tpu.memory_space<vmem>>, %arg7: memref<1x128xf32, #tpu.memory_space<vmem>>, %arg8: memref<8x128xf32, #tpu.memory_space<vmem>>) attributes {dimension_semantics = [#tpu.dimension_semantics<parallel>], iteration_bounds = array<i64: 1>, scalar_prefetch = 0 : i64, scratch_operands = 0 : i64, tpu.core_type = #tpu.core_type<tc>, window_params = [{transform_indices = @transform_0, window_bounds = array<i64: 8, 42>}, {pipeline_mode = #tpu.pipeline_mode<synchronous>, transform_indices = @transform_1, window_bounds = array<i64: 42, 128>}, {pipeline_mode = #tpu.pipeline_mode<synchronous>, transform_indices = @transform_2, window_bounds = array<i64: 1, 128>}, {pipeline_mode = #tpu.pipeline_mode<synchronous>, transform_indices = @transform_3, window_bounds = array<i64: 128, 64>}, {pipeline_mode = #tpu.pipeline_mode<synchronous>, transform_indices = @transform_4, window_bounds = array<i64: 1, 64>}, {pipeline_mode = #tpu.pipeline_mode<synchronous>, transform_indices = @transform_5, window_bounds = array<i64: 64, 128>}, {pipeline_mode = #tpu.pipeline_mode<synchronous>, transform_indices = @transform_6, window_bounds = array<i64: 1, 128>}, {transform_indices = @transform_7, window_bounds = array<i64: 8, 128>}]} {
    %c0 = arith.constant 0 : index
    %c0_0 = arith.constant 0 : index
    %0 = vector.load %arg1[%c0, %c0_0] : memref<8x42xf32, #tpu.memory_space<vmem>>, vector<8x42xf32>
    %1 = arith.truncf %0 : vector<8x42xf32> to vector<8x42xbf16>
    %c0_1 = arith.constant 0 : index
    %c0_2 = arith.constant 0 : index
    %2 = vector.load %arg2[%c0_1, %c0_2] : memref<42x128xbf16, #tpu.memory_space<vmem>>, vector<42x128xbf16>
    %cst = arith.constant dense<0.000000e+00> : vector<8x128xf32>
    %3 = tpu.matmul %1, %2, %cst {dimension_numbers = #tpu.dot_dimension_numbers<[1], [0], [0], [1], [0, 0, 1, 1], [], []>} : vector<8x42xbf16>, vector<42x128xbf16>, vector<8x128xf32> -> vector<8x128xf32>
    %c0_3 = arith.constant 0 : index
    %c0_4 = arith.constant 0 : index
    %4 = vector.load %arg3[%c0_3, %c0_4] : memref<1x128xf32, #tpu.memory_space<vmem>>, vector<1x128xf32>
    %5 = vector.broadcast %4 : vector<1x128xf32> to vector<8x128xf32>
    %6 = arith.addf %3, %5 : vector<8x128xf32>
    %cst_5 = arith.constant 0.000000e+00 : f32
    %7 = vector.broadcast %cst_5 : f32 to vector<8x128xf32>
    %8 = arith.maximumf %6, %7 : vector<8x128xf32>
    %9 = arith.truncf %8 : vector<8x128xf32> to vector<8x128xbf16>
    %c0_6 = arith.constant 0 : index
    %c0_7 = arith.constant 0 : index
    %10 = vector.load %arg4[%c0_6, %c0_7] : memref<128x64xbf16, #tpu.memory_space<vmem>>, vector<128x64xbf16>
    %cst_8 = arith.constant dense<0.000000e+00> : vector<8x64xf32>
    %11 = tpu.matmul %9, %10, %cst_8 {dimension_numbers = #tpu.dot_dimension_numbers<[1], [0], [0], [1], [0, 0, 1, 1], [], []>} : vector<8x128xbf16>, vector<128x64xbf16>, vector<8x64xf32> -> vector<8x64xf32>
    %c0_9 = arith.constant 0 : index
    %c0_10 = arith.constant 0 : index
    %12 = vector.load %arg5[%c0_9, %c0_10] : memref<1x64xf32, #tpu.memory_space<vmem>>, vector<1x64xf32>
    %13 = vector.broadcast %12 : vector<1x64xf32> to vector<8x64xf32>
    %14 = arith.addf %11, %13 : vector<8x64xf32>
    %cst_11 = arith.constant 0.000000e+00 : f32
    %15 = vector.broadcast %cst_11 : f32 to vector<8x64xf32>
    %16 = arith.maximumf %14, %15 : vector<8x64xf32>
    %17 = arith.truncf %16 : vector<8x64xf32> to vector<8x64xbf16>
    %c0_12 = arith.constant 0 : index
    %c0_13 = arith.constant 0 : index
    %18 = vector.load %arg6[%c0_12, %c0_13] : memref<64x128xbf16, #tpu.memory_space<vmem>>, vector<64x128xbf16>
    %cst_14 = arith.constant dense<0.000000e+00> : vector<8x128xf32>
    %19 = tpu.matmul %17, %18, %cst_14 {dimension_numbers = #tpu.dot_dimension_numbers<[1], [0], [0], [1], [0, 0, 1, 1], [], []>} : vector<8x64xbf16>, vector<64x128xbf16>, vector<8x128xf32> -> vector<8x128xf32>
    %c0_15 = arith.constant 0 : index
    %c0_16 = arith.constant 0 : index
    %20 = vector.load %arg7[%c0_15, %c0_16] : memref<1x128xf32, #tpu.memory_space<vmem>>, vector<1x128xf32>
    %21 = vector.broadcast %20 : vector<1x128xf32> to vector<8x128xf32>
    %22 = arith.addf %19, %21 : vector<8x128xf32>
    %c0_17 = arith.constant 0 : index
    %c0_18 = arith.constant 0 : index
    %23 = vector.load %arg8[%c0_17, %c0_18] : memref<8x128xf32, #tpu.memory_space<vmem>>, vector<8x128xf32>
    tpu.vector_store %arg8[%c0_17, %c0_18], %22 {strides = array<i32>} : memref<8x128xf32, #tpu.memory_space<vmem>>, vector<8x128xf32>,
    return
  }
  func.func @transform_0(%arg0: i32) -> (i32, i32) {
    %c0_i32 = arith.constant 0 : i32
    %c0_i32_0 = arith.constant 0 : i32
    return %arg0, %c0_i32 : i32, i32
  }
  func.func @transform_1(%arg0: i32) -> (i32, i32) {
    %c0_i32 = arith.constant 0 : i32
    %c0_i32_0 = arith.constant 0 : i32
    %c0_i32_1 = arith.constant 0 : i32
    return %c0_i32, %c0_i32_0 : i32, i32
  }
  func.func @transform_2(%arg0: i32) -> (i32, i32) {
    %c0_i32 = arith.constant 0 : i32
    %c0_i32_0 = arith.constant 0 : i32
    %c0_i32_1 = arith.constant 0 : i32
    return %c0_i32, %c0_i32_0 : i32, i32
  }
  func.func @transform_3(%arg0: i32) -> (i32, i32) {
    %c0_i32 = arith.constant 0 : i32
    %c0_i32_0 = arith.constant 0 : i32
    %c0_i32_1 = arith.constant 0 : i32
    return %c0_i32, %c0_i32_0 : i32, i32
  }
  func.func @transform_4(%arg0: i32) -> (i32, i32) {
    %c0_i32 = arith.constant 0 : i32
    %c0_i32_0 = arith.constant 0 : i32
    %c0_i32_1 = arith.constant 0 : i32
    return %c0_i32, %c0_i32_0 : i32, i32
  }
  func.func @transform_5(%arg0: i32) -> (i32, i32) {
    %c0_i32 = arith.constant 0 : i32
    %c0_i32_0 = arith.constant 0 : i32
    %c0_i32_1 = arith.constant 0 : i32
    return %c0_i32, %c0_i32_0 : i32, i32
  }
  func.func @transform_6(%arg0: i32) -> (i32, i32) {
    %c0_i32 = arith.constant 0 : i32
    %c0_i32_0 = arith.constant 0 : i32
    %c0_i32_1 = arith.constant 0 : i32
    return %c0_i32, %c0_i32_0 : i32, i32
  }
  func.func @transform_7(%arg0: i32) -> (i32, i32) {
    %c0_i32 = arith.constant 0 : i32
    %c0_i32_0 = arith.constant 0 : i32
    return %arg0, %c0_i32 : i32, i32
  }
}

</mosaic_0001>

<llo_original>
// kernel: mlp_forward.1
$region0: #{mlp_forward.1}
  #allocation0 [shape = 'u32[]', space=smem, size = 0x4, offset = 0x4, fixed_abs, tag = 'smem constant byte address 0x4 - core index']
  #allocation1 [shape = 'u32[144,128]{1,0:T(1,128)}', space=vmem, size = 0x12000, scoped, tag = 'internal scratch']
  %s0 = inlined_call_operand.vmem [shape: f32[8,42], index: 0, kind: input, shape index: {}]
  %s1 = inlined_call_operand.vmem [shape: bf16[42,128], index: 1, kind: input, shape index: {}]
  %s2 = inlined_call_operand.vmem [shape: f32[1,128], index: 2, kind: input, shape index: {}]
  %s3 = inlined_call_operand.vmem [shape: bf16[128,64], index: 3, kind: input, shape index: {}]
  %s4 = inlined_call_operand.vmem [shape: f32[1,64], index: 4, kind: input, shape index: {}]
  %s5 = inlined_call_operand.vmem [shape: bf16[64,128], index: 5, kind: input, shape index: {}]
  %s6 = inlined_call_operand.vmem [shape: f32[1,128], index: 6, kind: input, shape index: {}]
  %s7 = inlined_call_operand.hbm [shape: f32[8,128], index: 7, kind: output, shape index: {}]
  %s8 = sld [smem:[#allocation0]]
  $region38: #{mlp_forward.1} parent=0
    _
  %s10 = ssub.s32 1, %s8
  %s11 = scalar_select 0, %s10, %s8
  $region1: #{mlp_forward.1} parent=0
    #allocation2 [shape = 'u8[4096]{0}', space=vmem, size = 0x1000, scoped, tag = 'output window, operand 0, single buffered']
    #allocation3 [shape = 's32[1]{0}', space=sflag, size = 0x4, scoped, tag = 'scoped memory for mlp_forward.1']
    %12 = vsyncpa [#allocation3], 0
    // Predicated region
    $region2: #{mlp_forward.1} parent=1 // pred_check
      _
    $region3: #{mlp_forward.1} parent=1 // pred_check_branch
      %14 = sbr.rel (0) target = $region5
    $region4: #{mlp_forward.1} parent=1 // pred_region
      _
    $region5: #{mlp_forward.1} parent=1 // pred_fallthru
      _
    // Predicated region
    $region6: #{mlp_forward.1} parent=1 // pred_check
      _
    $region7: #{mlp_forward.1} parent=1 // pred_check_branch
      %16 = sbr.rel (0) target = $region9
    $region8: #{mlp_forward.1} parent=1 // pred_region
      _
    $region9: #{mlp_forward.1} parent=1 // pred_fallthru
      _
    // Predicated region
    $region10: #{mlp_forward.1} parent=1 // pred_check
      _
    $region11: #{mlp_forward.1} parent=1 // pred_check_branch
      %18 = sbr.rel (0) target = $region13
    $region12: #{mlp_forward.1} parent=1 // pred_region
      _
    $region13: #{mlp_forward.1} parent=1 // pred_fallthru
      _
    // Predicated region
    $region14: #{mlp_forward.1} parent=1 // pred_check
      _
    $region15: #{mlp_forward.1} parent=1 // pred_check_branch
      %20 = sbr.rel (0) target = $region17
    $region16: #{mlp_forward.1} parent=1 // pred_region
      _
    $region17: #{mlp_forward.1} parent=1 // pred_fallthru
      _
    // Predicated region
    $region18: #{mlp_forward.1} parent=1 // pred_check
      _
    $region19: #{mlp_forward.1} parent=1 // pred_check_branch
      %22 = sbr.rel (0) target = $region21
    $region20: #{mlp_forward.1} parent=1 // pred_region
      _
    $region21: #{mlp_forward.1} parent=1 // pred_fallthru
      _
    // Predicated region
    $region22: #{mlp_forward.1} parent=1 // pred_check
      _
    $region23: #{mlp_forward.1} parent=1 // pred_check_branch
      %24 = sbr.rel (0) target = $region25
    $region24: #{mlp_forward.1} parent=1 // pred_region
      _
    $region25: #{mlp_forward.1} parent=1 // pred_fallthru
      _
    // Predicated region
    $region26: #{mlp_forward.1} parent=1 // pred_check
      _
    $region27: #{mlp_forward.1} parent=1 // pred_check_branch
      %26 = sbr.rel (0) target = $region29
    $region28: #{mlp_forward.1} parent=1 // pred_region
      _
    $region29: #{mlp_forward.1} parent=1 // pred_fallthru
      _
    %v28 = vld [vmem:[%s0] sm:$0xff]
    %v29 = vpack.c.bf16 %v28, %v28
    %v30 = vld [vmem:[%s1] sm:$0xf]
    %v31 = vld [vmem:[%s1 + $0x4] sm:$0xf]
    %v32 = vld [vmem:[%s1 + $0x8] sm:$0xf]
    %v33 = vld [vmem:[%s1 + $0xc] sm:$0xf]
    %v34 = vld [vmem:[%s1 + $0x10] sm:$0xf]
    %v35 = vld [vmem:[%s1 + $0x14] sm:$0x1]
    %v36 = vld [vmem:[%s2] sm:$0x1]
    %v38 = vlaneseq
    %v39 = vshrl.u32 %v38, 7
    %v40 = vsub.s32 0, %v39
    %v41 = vrot.slane %v36, %v40
    %v49 = vunpack.c.l.b16 %v30
    %v50 = vunpack.c.l.b16 %v31
    %v51 = vunpack.c.l.b16 %v32
    %v52 = vunpack.c.l.b16 %v33
    %v53 = vunpack.c.l.b16 %v34
    %v54 = vunpack.c.l.b16 %v35
    %v55 = vpack.c.b16 %v50, %v49
    %v56 = vpack.c.b16 %v52, %v51
    %v57 = vpack.c.b16 %v54, %v53
    %vm60 = vcmask 343040
    %v62 = vsel %vm60, %v29, 0
    %vm64 = vcmask 1044480
    %v66 = vsel %vm64, %v57, 0
    %68 = vmatprep.subr.bf16.mxu0 0
    %69 = vmatpush1.bf16.msra.mxu0 %v55
    %70 = vmatprep.subr.bf16.mxu0 0
    %71 = vmatpush1.bf16.msra.mxu0 %v56
    %72 = vmatprep.subr.bf16.mxu0 0
    %73 = vmatpush1.bf16.msra.mxu0 %v66
    %74 = vmatprep.subr.bf16.mxu0 0
    %75 = vmatpush1.bf16.msra.mxu0 0
    %76 = vmatprep.subr.bf16.mxu0 0
    %77 = vmatpush1.bf16.msra.mxu0 0
    %78 = vmatprep.subr.bf16.mxu0 0
    %79 = vmatpush1.bf16.msra.mxu0 0
    %80 = vmatprep.subr.bf16.mxu0 0
    %81 = vmatpush1.bf16.msra.mxu0 0
    %82 = vmatprep.subr.bf16.mxu0 0
    %83 = vmatpush1.bf16.msra.mxu0 0
    %84 = vmatprep.subr.bf16.mxu0 0
    %85 = vmatpush1.bf16.msra.mxu0 0
    %86 = vmatprep.subr.bf16.mxu0 0
    %87 = vmatpush1.bf16.msra.mxu0 0
    %88 = vmatprep.subr.bf16.mxu0 0
    %89 = vmatpush1.bf16.msra.mxu0 0
    %90 = vmatprep.subr.bf16.mxu0 0
    %91 = vmatpush1.bf16.msra.mxu0 0
    %92 = vmatprep.subr.bf16.mxu0 0
    %93 = vmatpush1.bf16.msra.mxu0 0
    %94 = vmatprep.subr.bf16.mxu0 0
    %95 = vmatpush1.bf16.msra.mxu0 0
    %96 = vmatprep.subr.bf16.mxu0 0
    %97 = vmatpush1.bf16.msra.mxu0 0
    %98 = vmatprep.subr.bf16.mxu0 0
    %99 = vmatpush1.bf16.msra.mxu0 0
    %100 = vmatprep.mubr.bf16.mxu0 0
    %101 = vmatmul.mubr.bf16.gmra.mrb[0].mxu0 %v62
    %v102 = vpop.f32.mrb[0].mxu0
    %v103 = vadd.f32 %v41, %v102
    %v104 = vpop.f32.mrb[0].mxu0
    %v105 = vpop.f32.mrb[0].mxu0
    %v106 = vpop.f32.mrb[0].mxu0
    %107 = vdwg.mxu0
    %v108 = vmax.f32 %v103, 0.0
    %v109 = vpack.c.bf16 %v108, %v108
    %v110 = vld [vmem:[%s3] sm:$0xf]
    %v111 = vld [vmem:[%s3 + $0x4] sm:$0xf]
    %v112 = vld [vmem:[%s3 + $0x8] sm:$0xf]
    %v113 = vld [vmem:[%s3 + $0xc] sm:$0xf]
    %v114 = vld [vmem:[%s3 + $0x10] sm:$0xf]
    %v115 = vld [vmem:[%s3 + $0x14] sm:$0xf]
    %v116 = vld [vmem:[%s3 + $0x18] sm:$0xf]
    %v117 = vld [vmem:[%s3 + $0x1c] sm:$0xf]
    %v118 = vld [vmem:[%s3 + $0x20] sm:$0xf]
    %v119 = vld [vmem:[%s3 + $0x24] sm:$0xf]
    %v120 = vld [vmem:[%s3 + $0x28] sm:$0xf]
    %v121 = vld [vmem:[%s3 + $0x2c] sm:$0xf]
    %v122 = vld [vmem:[%s3 + $0x30] sm:$0xf]
    %v123 = vld [vmem:[%s3 + $0x34] sm:$0xf]
    %v124 = vld [vmem:[%s3 + $0x38] sm:$0xf]
    %v125 = vld [vmem:[%s3 + $0x3c] sm:$0xf]
    %v126 = vld [vmem:[%s4] sm:$0x1]
    %v128 = vlaneseq
    %v129 = vshrl.u32 %v128, 7
    %v130 = vsub.s32 0, %v129
    %v131 = vrot.slane %v126, %v130
    %v149 = vunpack.c.l.b16 %v110
    %v150 = vunpack.c.l.b16 %v111
    %v151 = vunpack.c.l.b16 %v112
    %v152 = vunpack.c.l.b16 %v113
    %v153 = vunpack.c.l.b16 %v114
    %v154 = vunpack.c.l.b16 %v115
    %v155 = vunpack.c.l.b16 %v116
    %v156 = vunpack.c.l.b16 %v117
    %v157 = vunpack.c.l.b16 %v118
    %v158 = vunpack.c.l.b16 %v119
    %v159 = vunpack.c.l.b16 %v120
    %v160 = vunpack.c.l.b16 %v121
    %v161 = vunpack.c.l.b16 %v122
    %v162 = vunpack.c.l.b16 %v123
    %v163 = vunpack.c.l.b16 %v124
    %v164 = vunpack.c.l.b16 %v125
    %v165 = vpack.c.b16 %v150, %v149
    %v166 = vpack.c.b16 %v152, %v151
    %v167 = vpack.c.b16 %v154, %v153
    %v168 = vpack.c.b16 %v156, %v155
    %v169 = vpack.c.b16 %v158, %v157
    %v170 = vpack.c.b16 %v160, %v159
    %v171 = vpack.c.b16 %v162, %v161
    %v172 = vpack.c.b16 %v164, %v163
    %181 = vmatprep.subr.bf16.mxu0 0
    %182 = vmatpush1.bf16.msra.mxu0 %v165
    %183 = vmatprep.subr.bf16.mxu0 0
    %184 = vmatpush1.bf16.msra.mxu0 %v166
    %185 = vmatprep.subr.bf16.mxu0 0
    %186 = vmatpush1.bf16.msra.mxu0 %v167
    %187 = vmatprep.subr.bf16.mxu0 0
    %188 = vmatpush1.bf16.msra.mxu0 %v168
    %189 = vmatprep.subr.bf16.mxu0 0
    %190 = vmatpush1.bf16.msra.mxu0 %v169
    %191 = vmatprep.subr.bf16.mxu0 0
    %192 = vmatpush1.bf16.msra.mxu0 %v170
    %193 = vmatprep.subr.bf16.mxu0 0
    %194 = vmatpush1.bf16.msra.mxu0 %v171
    %195 = vmatprep.subr.bf16.mxu0 0
    %196 = vmatpush1.bf16.msra.mxu0 %v172
    %197 = vmatprep.subr.bf16.mxu0 0
    %198 = vmatpush1.bf16.msra.mxu0 0
    %199 = vmatprep.subr.bf16.mxu0 0
    %200 = vmatpush1.bf16.msra.mxu0 0
    %201 = vmatprep.subr.bf16.mxu0 0
    %202 = vmatpush1.bf16.msra.mxu0 0
    %203 = vmatprep.subr.bf16.mxu0 0
    %204 = vmatpush1.bf16.msra.mxu0 0
    %205 = vmatprep.subr.bf16.mxu0 0
    %206 = vmatpush1.bf16.msra.mxu0 0
    %207 = vmatprep.subr.bf16.mxu0 0
    %208 = vmatpush1.bf16.msra.mxu0 0
    %209 = vmatprep.subr.bf16.mxu0 0
    %210 = vmatpush1.bf16.msra.mxu0 0
    %211 = vmatprep.subr.bf16.mxu0 0
    %212 = vmatpush1.bf16.msra.mxu0 0
    %213 = vmatprep.mubr.bf16.mxu0 0
    %214 = vmatmul.mubr.bf16.gmra.mrb[0].mxu0 %v109
    %v215 = vpop.f32.mrb[0].mxu0
    %v216 = vadd.f32 %v131, %v215
    %v217 = vpop.f32.mrb[0].mxu0
    %v218 = vpop.f32.mrb[0].mxu0
    %v219 = vpop.f32.mrb[0].mxu0
    %220 = vdwg.mxu0
    %v221 = vmax.f32 %v216, 0.0
    %v222 = vpack.c.bf16 %v221, %v221
    %v223 = vld [vmem:[%s5] sm:$0xf]
    %v224 = vld [vmem:[%s5 + $0x4] sm:$0xf]
    %v225 = vld [vmem:[%s5 + $0x8] sm:$0xf]
    %v226 = vld [vmem:[%s5 + $0xc] sm:$0xf]
    %v227 = vld [vmem:[%s5 + $0x10] sm:$0xf]
    %v228 = vld [vmem:[%s5 + $0x14] sm:$0xf]
    %v229 = vld [vmem:[%s5 + $0x18] sm:$0xf]
    %v230 = vld [vmem:[%s5 + $0x1c] sm:$0xf]
    %v231 = vld [vmem:[%s6] sm:$0x1]
    %v233 = vlaneseq
    %v234 = vshrl.u32 %v233, 7
    %v235 = vsub.s32 0, %v234
    %v236 = vrot.slane %v231, %v235
    %v246 = vunpack.c.l.b16 %v223
    %v247 = vunpack.c.l.b16 %v224
    %v248 = vunpack.c.l.b16 %v225
    %v249 = vunpack.c.l.b16 %v226
    %v250 = vunpack.c.l.b16 %v227
    %v251 = vunpack.c.l.b16 %v228
    %v252 = vunpack.c.l.b16 %v229
    %v253 = vunpack.c.l.b16 %v230
    %v254 = vpack.c.b16 %v247, %v246
    %v255 = vpack.c.b16 %v249, %v248
    %v256 = vpack.c.b16 %v251, %v250
    %v257 = vpack.c.b16 %v253, %v252
    %vm262 = vcmask 523264
    %v264 = vsel %vm262, %v222, 0
    %266 = vmatprep.subr.bf16.mxu0 0
    %267 = vmatpush1.bf16.msra.mxu0 %v254
    %268 = vmatprep.subr.bf16.mxu0 0
    %269 = vmatpush1.bf16.msra.mxu0 %v255
    %270 = vmatprep.subr.bf16.mxu0 0
    %271 = vmatpush1.bf16.msra.mxu0 %v256
    %272 = vmatprep.subr.bf16.mxu0 0
    %273 = vmatpush1.bf16.msra.mxu0 %v257
    %274 = vmatprep.subr.bf16.mxu0 0
    %275 = vmatpush1.bf16.msra.mxu0 0
    %276 = vmatprep.subr.bf16.mxu0 0
    %277 = vmatpush1.bf16.msra.mxu0 0
    %278 = vmatprep.subr.bf16.mxu0 0
    %279 = vmatpush1.bf16.msra.mxu0 0
    %280 = vmatprep.subr.bf16.mxu0 0
    %281 = vmatpush1.bf16.msra.mxu0 0
    %282 = vmatprep.subr.bf16.mxu0 0
    %283 = vmatpush1.bf16.msra.mxu0 0
    %284 = vmatprep.subr.bf16.mxu0 0
    %285 = vmatpush1.bf16.msra.mxu0 0
    %286 = vmatprep.subr.bf16.mxu0 0
    %287 = vmatpush1.bf16.msra.mxu0 0
    %288 = vmatprep.subr.bf16.mxu0 0
    %289 = vmatpush1.bf16.msra.mxu0 0
    %290 = vmatprep.subr.bf16.mxu0 0
    %291 = vmatpush1.bf16.msra.mxu0 0
    %292 = vmatprep.subr.bf16.mxu0 0
    %293 = vmatpush1.bf16.msra.mxu0 0
    %294 = vmatprep.subr.bf16.mxu0 0
    %295 = vmatpush1.bf16.msra.mxu0 0
    %296 = vmatprep.subr.bf16.mxu0 0
    %297 = vmatpush1.bf16.msra.mxu0 0
    %298 = vmatprep.mubr.bf16.mxu0 0
    %299 = vmatmul.mubr.bf16.gmra.mrb[0].mxu0 %v264
    %v300 = vpop.f32.mrb[0].mxu0
    %v301 = vadd.f32 %v236, %v300
    %v302 = vpop.f32.mrb[0].mxu0
    %v303 = vpop.f32.mrb[0].mxu0
    %v304 = vpop.f32.mrb[0].mxu0
    %305 = vdwg.mxu0
    %306 = vst [vmem:[#allocation2] sm:$0xff] %v301
    // Predicated region
    $region30: #{mlp_forward.1} parent=1 // pred_check
      _
    $region31: #{mlp_forward.1} parent=1 // pred_check_branch
      %308 = sbr.rel (0) target = $region33
    $region32: #{mlp_forward.1} parent=1 // pred_region
      %s310 = ssub.s32 128, 128
      %311 = vsyncadd [#allocation3], %s310
      %s313 = sshll.u32 [#allocation2], 4
      %s314 = int_to_ptr.vmem [resolvable:$true] %s313
      %316 = dma.vmem_to_hbm [thread:$0]  %s314, 128, %s7, [#allocation3]
    $region33: #{mlp_forward.1} parent=1 // pred_fallthru
      _
    // Predicated region
    $region34: #{mlp_forward.1} parent=1 // pred_check
      _
    $region35: #{mlp_forward.1} parent=1 // pred_check_branch
      %318 = sbr.rel (0) target = $region37
    $region36: #{mlp_forward.1} parent=1 // pred_region
      %319 = dma.done [#allocation3], 128
    $region37: #{mlp_forward.1} parent=1 // pred_fallthru
      _
    %320 = vsyncpa [#allocation3], 1

</llo_original>
